<compile_context>
chip_gen: v5e
topology: v5e:2x2
jax: 0.10.0
libtpu: 0.0.40
codegen_flags: <defaults>
</compile_context>

<pallas_src>
import functools

import jax
import jax.numpy as jnp
from jax.experimental import pallas as pl
from jax.experimental.pallas import tpu as pltpu

NEG_SLOPE = 0.01          # nn.LeakyReLU default
LANE = 128                # TPU lane width
DIMS = (2, 4, 8, 4, 1)    # layer widths


def _leaky_relu(x):
    # max(x, a*x) == leaky_relu(x) for 0 < a < 1 ; one mul + one max on the VPU
    return jnp.maximum(x, NEG_SLOPE * x)


def _vpu_dense(h, w_ref, b_ref, f_out, f_in, act):
    """Dense layer as scalar-broadcast FMAs on (rows, 128) tiles.

    h       : list of f_in dense f32 tiles (BLOCK_ROWS, 128)
    w_ref   : SMEM ref, shape (f_out, f_in)   (PyTorch layout: W[out, in])
    b_ref   : SMEM ref, shape (f_out,)
    returns : list of f_out tiles
    """
    outs = []
    for j in range(f_out):
        acc = w_ref[j, 0] * h[0]
        for k in range(1, f_in):
            acc = acc + w_ref[j, k] * h[k]
        acc = acc + b_ref[j]
        outs.append(act(acc) if act is not None else acc)
    return outs


def mlp_tanh_kernel(w1_ref, b1_ref, w2_ref, b2_ref, w3_ref, b3_ref,
                    w4_ref, b4_ref, x_ref, o_ref):
    """x_ref: (2, BLOCK_ROWS, 128) batch-on-lanes tile. o_ref: (BLOCK_ROWS, 128)."""
    h = [x_ref[k] for k in range(DIMS[0])]
    h = _vpu_dense(h, w1_ref, b1_ref, DIMS[1], DIMS[0], _leaky_relu)
    h = _vpu_dense(h, w2_ref, b2_ref, DIMS[2], DIMS[1], _leaky_relu)
    h = _vpu_dense(h, w3_ref, b3_ref, DIMS[3], DIMS[2], _leaky_relu)
    h = _vpu_dense(h, w4_ref, b4_ref, DIMS[4], DIMS[3], None)
    o_ref[...] = jnp.tanh(h[0]).astype(o_ref.dtype)


@functools.partial(jax.jit, static_argnames=("block_rows",))
def net_forward(x, params, block_rows=512):
    """x: (N, 2) float32  ->  (N, 1) float32.

    block_rows rows of 128 samples per grid step (default 512 -> 65536 samples);
    double-buffered input+output blocks use ~1.5 MiB of VMEM, far under the
    16/32 MiB scoped defaults on v5e/v6e/v7x.
    """
    (w1, b1, w2, b2, w3, b3, w4, b4) = params
    n = x.shape[0]

    total_rows = pl.cdiv(n, LANE)
    # block_rows must be a multiple of 8 (sublane constraint); shrink for tiny N.
    block_rows = max(8, min(block_rows, ((total_rows + 7) // 8) * 8))
    grid_r = pl.cdiv(total_rows, block_rows)
    rows_pad = grid_r * block_rows
    n_pad = rows_pad * LANE

    # Pad batch, put batch on the lane axis: (N,2) -> (2, rows_pad, 128).
    # (Layout plumbing only; the kernel then sees lane-dense tiles.)
    x_pad = jnp.pad(x.astype(jnp.float32), ((0, n_pad - n), (0, 0)))
    xt = x_pad.T.reshape(DIMS[0], rows_pad, LANE)

    smem = pl.BlockSpec(memory_space=pltpu.MemorySpace.SMEM)

    out2d = pl.pallas_call(
        mlp_tanh_kernel,
        out_shape=jax.ShapeDtypeStruct((rows_pad, LANE), jnp.float32),
        grid=(grid_r,),
        in_specs=[smem] * 8 + [
            pl.BlockSpec((DIMS[0], block_rows, LANE), lambda i: (0, i, 0)),
        ],
        out_specs=pl.BlockSpec((block_rows, LANE), lambda i: (i, 0)),
        compiler_params=pltpu.CompilerParams(
            dimension_semantics=("parallel",)),
        cost_estimate=pl.CostEstimate(
            flops=2 * 76 * n_pad,            # 76 MACs per sample
            transcendentals=n_pad,           # one tanh per sample
            bytes_accessed=12 * n_pad),      # 2 f32 in + 1 f32 out per sample
    )(w1, b1, w2, b2, w3, b3, w4, b4, xt)

    # Back to PyTorch layout (N, 1); drop batch padding.
    return out2d.reshape(n_pad)[:n].reshape(n, 1)


def init_params(key):
    """PyTorch-convention params: W is (out, in), b is (out,)."""
    params = []
    for din, dout in zip(DIMS[:-1], DIMS[1:]):
        kw, kb, key = jax.random.split(key, 3)
        bound = 1.0 / float(jnp.sqrt(jnp.float32(din)))
        w = jax.random.uniform(kw, (dout, din), jnp.float32, -bound, bound)
        b = jax.random.uniform(kb, (dout,), jnp.float32, -bound, bound)
        params.extend([w, b])
    return tuple(params)


def reference_forward(x, params):
    """Pure-JAX reference (PyTorch Linear semantics: x @ W.T + b)."""
    (w1, b1, w2, b2, w3, b3, w4, b4) = params
    h = _leaky_relu(x @ w1.T + b1)
    h = _leaky_relu(h @ w2.T + b2)
    h = _leaky_relu(h @ w3.T + b3)
    h = h @ w4.T + b4
    return jnp.tanh(h)


if __name__ == "__main__":
    key = jax.random.PRNGKey(0)
    kx, kx2, kp = jax.random.split(key, 3)

    params = init_params(kp)

    # Small primary check (batch=8).
    x = jax.random.normal(kx, (8, 2), dtype=jnp.float32)
    out = jax.block_until_ready(net_forward(x, params))
    ref = reference_forward(x, params)
    assert out.shape == (8, 1)
    assert jnp.allclose(out, ref, atol=1e-5, rtol=1e-5)

    # Non-multiple-of-128 batch to exercise padding / reshape path.
    x2 = jax.random.normal(kx2, (389, 2), dtype=jnp.float32)
    out2 = jax.block_until_ready(net_forward(x2, params))
    ref2 = reference_forward(x2, params)
    assert out2.shape == (389, 1)
    assert jnp.allclose(out2, ref2, atol=1e-5, rtol=1e-5)

    print("KERNEL_OK")
</pallas_src>

<mosaic_0001>
module attributes {stable_mosaic.version = 11 : i64} {
  func.func @mlp_tanh_kernel(%arg0: i32, %arg1: memref<4x2xf32, #tpu.memory_space<smem>>, %arg2: memref<4xf32, #tpu.memory_space<smem>>, %arg3: memref<8x4xf32, #tpu.memory_space<smem>>, %arg4: memref<8xf32, #tpu.memory_space<smem>>, %arg5: memref<4x8xf32, #tpu.memory_space<smem>>, %arg6: memref<4xf32, #tpu.memory_space<smem>>, %arg7: memref<1x4xf32, #tpu.memory_space<smem>>, %arg8: memref<1xf32, #tpu.memory_space<smem>>, %arg9: memref<2x8x128xf32, #tpu.memory_space<vmem>>, %arg10: memref<8x128xf32, #tpu.memory_space<vmem>>) attributes {dimension_semantics = [#tpu.dimension_semantics<parallel>], iteration_bounds = array<i64: 1>, scalar_prefetch = 0 : i64, scratch_operands = 0 : i64, tpu.core_type = #tpu.core_type<tc>, window_params = [{transform_indices = @transform_0, window_bounds = array<i64: 4, 2>}, {transform_indices = @transform_1, window_bounds = array<i64: 4>}, {transform_indices = @transform_2, window_bounds = array<i64: 8, 4>}, {transform_indices = @transform_3, window_bounds = array<i64: 8>}, {transform_indices = @transform_4, window_bounds = array<i64: 4, 8>}, {transform_indices = @transform_5, window_bounds = array<i64: 4>}, {transform_indices = @transform_6, window_bounds = array<i64: 1, 4>}, {transform_indices = @transform_7, window_bounds = array<i64: 1>}, {transform_indices = @transform_8, window_bounds = array<i64: 2, 8, 128>}, {transform_indices = @transform_9, window_bounds = array<i64: 8, 128>}]} {
    %c0 = arith.constant 0 : index
    %c0_0 = arith.constant 0 : index
    %c0_1 = arith.constant 0 : index
    %0 = vector.load %arg9[%c0, %c0_0, %c0_1] : memref<2x8x128xf32, #tpu.memory_space<vmem>>, vector<1x8x128xf32>
    %1 = vector.shape_cast %0 : vector<1x8x128xf32> to vector<8x128xf32>
    %c1 = arith.constant 1 : index
    %c0_2 = arith.constant 0 : index
    %c0_3 = arith.constant 0 : index
    %2 = vector.load %arg9[%c1, %c0_2, %c0_3] : memref<2x8x128xf32, #tpu.memory_space<vmem>>, vector<1x8x128xf32>
    %3 = vector.shape_cast %2 : vector<1x8x128xf32> to vector<8x128xf32>
    %c0_4 = arith.constant 0 : index
    %c0_5 = arith.constant 0 : index
    %4 = memref.load %arg1[%c0_4, %c0_5] : memref<4x2xf32, #tpu.memory_space<smem>>
    %5 = vector.broadcast %4 : f32 to vector<8x128xf32>
    %6 = arith.mulf %5, %1 : vector<8x128xf32>
    %c0_6 = arith.constant 0 : index
    %c1_7 = arith.constant 1 : index
    %7 = memref.load %arg1[%c0_6, %c1_7] : memref<4x2xf32, #tpu.memory_space<smem>>
    %8 = vector.broadcast %7 : f32 to vector<8x128xf32>
    %9 = arith.mulf %8, %3 : vector<8x128xf32>
    %10 = arith.addf %6, %9 : vector<8x128xf32>
    %c0_8 = arith.constant 0 : index
    %11 = memref.load %arg2[%c0_8] : memref<4xf32, #tpu.memory_space<smem>>
    %12 = vector.broadcast %11 : f32 to vector<8x128xf32>
    %13 = arith.addf %10, %12 : vector<8x128xf32>
    %cst = arith.constant 0.00999999977 : f32
    %14 = vector.broadcast %cst : f32 to vector<8x128xf32>
    %15 = arith.mulf %14, %13 : vector<8x128xf32>
    %16 = arith.maximumf %13, %15 : vector<8x128xf32>
    %c1_9 = arith.constant 1 : index
    %c0_10 = arith.constant 0 : index
    %17 = memref.load %arg1[%c1_9, %c0_10] : memref<4x2xf32, #tpu.memory_space<smem>>
    %18 = vector.broadcast %17 : f32 to vector<8x128xf32>
    %19 = arith.mulf %18, %1 : vector<8x128xf32>
    %c1_11 = arith.constant 1 : index
    %c1_12 = arith.constant 1 : index
    %20 = memref.load %arg1[%c1_11, %c1_12] : memref<4x2xf32, #tpu.memory_space<smem>>
    %21 = vector.broadcast %20 : f32 to vector<8x128xf32>
    %22 = arith.mulf %21, %3 : vector<8x128xf32>
    %23 = arith.addf %19, %22 : vector<8x128xf32>
    %c1_13 = arith.constant 1 : index
    %24 = memref.load %arg2[%c1_13] : memref<4xf32, #tpu.memory_space<smem>>
    %25 = vector.broadcast %24 : f32 to vector<8x128xf32>
    %26 = arith.addf %23, %25 : vector<8x128xf32>
    %cst_14 = arith.constant 0.00999999977 : f32
    %27 = vector.broadcast %cst_14 : f32 to vector<8x128xf32>
    %28 = arith.mulf %27, %26 : vector<8x128xf32>
    %29 = arith.maximumf %26, %28 : vector<8x128xf32>
    %c2 = arith.constant 2 : index
    %c0_15 = arith.constant 0 : index
    %30 = memref.load %arg1[%c2, %c0_15] : memref<4x2xf32, #tpu.memory_space<smem>>
    %31 = vector.broadcast %30 : f32 to vector<8x128xf32>
    %32 = arith.mulf %31, %1 : vector<8x128xf32>
    %c2_16 = arith.constant 2 : index
    %c1_17 = arith.constant 1 : index
    %33 = memref.load %arg1[%c2_16, %c1_17] : memref<4x2xf32, #tpu.memory_space<smem>>
    %34 = vector.broadcast %33 : f32 to vector<8x128xf32>
    %35 = arith.mulf %34, %3 : vector<8x128xf32>
    %36 = arith.addf %32, %35 : vector<8x128xf32>
    %c2_18 = arith.constant 2 : index
    %37 = memref.load %arg2[%c2_18] : memref<4xf32, #tpu.memory_space<smem>>
    %38 = vector.broadcast %37 : f32 to vector<8x128xf32>
    %39 = arith.addf %36, %38 : vector<8x128xf32>
    %cst_19 = arith.constant 0.00999999977 : f32
    %40 = vector.broadcast %cst_19 : f32 to vector<8x128xf32>
    %41 = arith.mulf %40, %39 : vector<8x128xf32>
    %42 = arith.maximumf %39, %41 : vector<8x128xf32>
    %c3 = arith.constant 3 : index
    %c0_20 = arith.constant 0 : index
    %43 = memref.load %arg1[%c3, %c0_20] : memref<4x2xf32, #tpu.memory_space<smem>>
    %44 = vector.broadcast %43 : f32 to vector<8x128xf32>
    %45 = arith.mulf %44, %1 : vector<8x128xf32>
    %c3_21 = arith.constant 3 : index
    %c1_22 = arith.constant 1 : index
    %46 = memref.load %arg1[%c3_21, %c1_22] : memref<4x2xf32, #tpu.memory_space<smem>>
    %47 = vector.broadcast %46 : f32 to vector<8x128xf32>
    %48 = arith.mulf %47, %3 : vector<8x128xf32>
    %49 = arith.addf %45, %48 : vector<8x128xf32>
    %c3_23 = arith.constant 3 : index
    %50 = memref.load %arg2[%c3_23] : memref<4xf32, #tpu.memory_space<smem>>
    %51 = vector.broadcast %50 : f32 to vector<8x128xf32>
    %52 = arith.addf %49, %51 : vector<8x128xf32>
    %cst_24 = arith.constant 0.00999999977 : f32
    %53 = vector.broadcast %cst_24 : f32 to vector<8x128xf32>
    %54 = arith.mulf %53, %52 : vector<8x128xf32>
    %55 = arith.maximumf %52, %54 : vector<8x128xf32>
    %c0_25 = arith.constant 0 : index
    %c0_26 = arith.constant 0 : index
    %56 = memref.load %arg3[%c0_25, %c0_26] : memref<8x4xf32, #tpu.memory_space<smem>>
    %57 = vector.broadcast %56 : f32 to vector<8x128xf32>
    %58 = arith.mulf %57, %16 : vector<8x128xf32>
    %c0_27 = arith.constant 0 : index
    %c1_28 = arith.constant 1 : index
    %59 = memref.load %arg3[%c0_27, %c1_28] : memref<8x4xf32, #tpu.memory_space<smem>>
    %60 = vector.broadcast %59 : f32 to vector<8x128xf32>
    %61 = arith.mulf %60, %29 : vector<8x128xf32>
    %62 = arith.addf %58, %61 : vector<8x128xf32>
    %c0_29 = arith.constant 0 : index
    %c2_30 = arith.constant 2 : index
    %63 = memref.load %arg3[%c0_29, %c2_30] : memref<8x4xf32, #tpu.memory_space<smem>>
    %64 = vector.broadcast %63 : f32 to vector<8x128xf32>
    %65 = arith.mulf %64, %42 : vector<8x128xf32>
    %66 = arith.addf %62, %65 : vector<8x128xf32>
    %c0_31 = arith.constant 0 : index
    %c3_32 = arith.constant 3 : index
    %67 = memref.load %arg3[%c0_31, %c3_32] : memref<8x4xf32, #tpu.memory_space<smem>>
    %68 = vector.broadcast %67 : f32 to vector<8x128xf32>
    %69 = arith.mulf %68, %55 : vector<8x128xf32>
    %70 = arith.addf %66, %69 : vector<8x128xf32>
    %c0_33 = arith.constant 0 : index
    %71 = memref.load %arg4[%c0_33] : memref<8xf32, #tpu.memory_space<smem>>
    %72 = vector.broadcast %71 : f32 to vector<8x128xf32>
    %73 = arith.addf %70, %72 : vector<8x128xf32>
    %cst_34 = arith.constant 0.00999999977 : f32
    %74 = vector.broadcast %cst_34 : f32 to vector<8x128xf32>
    %75 = arith.mulf %74, %73 : vector<8x128xf32>
    %76 = arith.maximumf %73, %75 : vector<8x128xf32>
    %c1_35 = arith.constant 1 : index
    %c0_36 = arith.constant 0 : index
    %77 = memref.load %arg3[%c1_35, %c0_36] : memref<8x4xf32, #tpu.memory_space<smem>>
    %78 = vector.broadcast %77 : f32 to vector<8x128xf32>
    %79 = arith.mulf %78, %16 : vector<8x128xf32>
    %c1_37 = arith.constant 1 : index
    %c1_38 = arith.constant 1 : index
    %80 = memref.load %arg3[%c1_37, %c1_38] : memref<8x4xf32, #tpu.memory_space<smem>>
    %81 = vector.broadcast %80 : f32 to vector<8x128xf32>
    %82 = arith.mulf %81, %29 : vector<8x128xf32>
    %83 = arith.addf %79, %82 : vector<8x128xf32>
    %c1_39 = arith.constant 1 : index
    %c2_40 = arith.constant 2 : index
    %84 = memref.load %arg3[%c1_39, %c2_40] : memref<8x4xf32, #tpu.memory_space<smem>>
    %85 = vector.broadcast %84 : f32 to vector<8x128xf32>
    %86 = arith.mulf %85, %42 : vector<8x128xf32>
    %87 = arith.addf %83, %86 : vector<8x128xf32>
    %c1_41 = arith.constant 1 : index
    %c3_42 = arith.constant 3 : index
    %88 = memref.load %arg3[%c1_41, %c3_42] : memref<8x4xf32, #tpu.memory_space<smem>>
    %89 = vector.broadcast %88 : f32 to vector<8x128xf32>
    %90 = arith.mulf %89, %55 : vector<8x128xf32>
    %91 = arith.addf %87, %90 : vector<8x128xf32>
    %c1_43 = arith.constant 1 : index
    %92 = memref.load %arg4[%c1_43] : memref<8xf32, #tpu.memory_space<smem>>
    %93 = vector.broadcast %92 : f32 to vector<8x128xf32>
    %94 = arith.addf %91, %93 : vector<8x128xf32>
    %cst_44 = arith.constant 0.00999999977 : f32
    %95 = vector.broadcast %cst_44 : f32 to vector<8x128xf32>
    %96 = arith.mulf %95, %94 : vector<8x128xf32>
    %97 = arith.maximumf %94, %96 : vector<8x128xf32>
    %c2_45 = arith.constant 2 : index
    %c0_46 = arith.constant 0 : index
    %98 = memref.load %arg3[%c2_45, %c0_46] : memref<8x4xf32, #tpu.memory_space<smem>>
    %99 = vector.broadcast %98 : f32 to vector<8x128xf32>
    %100 = arith.mulf %99, %16 : vector<8x128xf32>
    %c2_47 = arith.constant 2 : index
    %c1_48 = arith.constant 1 : index
    %101 = memref.load %arg3[%c2_47, %c1_48] : memref<8x4xf32, #tpu.memory_space<smem>>
    %102 = vector.broadcast %101 : f32 to vector<8x128xf32>
    %103 = arith.mulf %102, %29 : vector<8x128xf32>
    %104 = arith.addf %100, %103 : vector<8x128xf32>
    %c2_49 = arith.constant 2 : index
    %c2_50 = arith.constant 2 : index
    %105 = memref.load %arg3[%c2_49, %c2_50] : memref<8x4xf32, #tpu.memory_space<smem>>
    %106 = vector.broadcast %105 : f32 to vector<8x128xf32>
    %107 = arith.mulf %106, %42 : vector<8x128xf32>
    %108 = arith.addf %104, %107 : vector<8x128xf32>
    %c2_51 = arith.constant 2 : index
    %c3_52 = arith.constant 3 : index
    %109 = memref.load %arg3[%c2_51, %c3_52] : memref<8x4xf32, #tpu.memory_space<smem>>
    %110 = vector.broadcast %109 : f32 to vector<8x128xf32>
    %111 = arith.mulf %110, %55 : vector<8x128xf32>
    %112 = arith.addf %108, %111 : vector<8x128xf32>
    %c2_53 = arith.constant 2 : index
    %113 = memref.load %arg4[%c2_53] : memref<8xf32, #tpu.memory_space<smem>>
    %114 = vector.broadcast %113 : f32 to vector<8x128xf32>
    %115 = arith.addf %112, %114 : vector<8x128xf32>
    %cst_54 = arith.constant 0.00999999977 : f32
    %116 = vector.broadcast %cst_54 : f32 to vector<8x128xf32>
    %117 = arith.mulf %116, %115 : vector<8x128xf32>
    %118 = arith.maximumf %115, %117 : vector<8x128xf32>
    %c3_55 = arith.constant 3 : index
    %c0_56 = arith.constant 0 : index
    %119 = memref.load %arg3[%c3_55, %c0_56] : memref<8x4xf32, #tpu.memory_space<smem>>
    %120 = vector.broadcast %119 : f32 to vector<8x128xf32>
    %121 = arith.mulf %120, %16 : vector<8x128xf32>
    %c3_57 = arith.constant 3 : index
    %c1_58 = arith.constant 1 : index
    %122 = memref.load %arg3[%c3_57, %c1_58] : memref<8x4xf32, #tpu.memory_space<smem>>
    %123 = vector.broadcast %122 : f32 to vector<8x128xf32>
    %124 = arith.mulf %123, %29 : vector<8x128xf32>
    %125 = arith.addf %121, %124 : vector<8x128xf32>
    %c3_59 = arith.constant 3 : index
    %c2_60 = arith.constant 2 : index
    %126 = memref.load %arg3[%c3_59, %c2_60] : memref<8x4xf32, #tpu.memory_space<smem>>
    %127 = vector.broadcast %126 : f32 to vector<8x128xf32>
    %128 = arith.mulf %127, %42 : vector<8x128xf32>
    %129 = arith.addf %125, %128 : vector<8x128xf32>
    %c3_61 = arith.constant 3 : index
    %c3_62 = arith.constant 3 : index
    %130 = memref.load %arg3[%c3_61, %c3_62] : memref<8x4xf32, #tpu.memory_space<smem>>
    %131 = vector.broadcast %130 : f32 to vector<8x128xf32>
    %132 = arith.mulf %131, %55 : vector<8x128xf32>
    %133 = arith.addf %129, %132 : vector<8x128xf32>
    %c3_63 = arith.constant 3 : index
    %134 = memref.load %arg4[%c3_63] : memref<8xf32, #tpu.memory_space<smem>>
    %135 = vector.broadcast %134 : f32 to vector<8x128xf32>
    %136 = arith.addf %133, %135 : vector<8x128xf32>
    %cst_64 = arith.constant 0.00999999977 : f32
    %137 = vector.broadcast %cst_64 : f32 to vector<8x128xf32>
    %138 = arith.mulf %137, %136 : vector<8x128xf32>
    %139 = arith.maximumf %136, %138 : vector<8x128xf32>
    %c4 = arith.constant 4 : index
    %c0_65 = arith.constant 0 : index
    %140 = memref.load %arg3[%c4, %c0_65] : memref<8x4xf32, #tpu.memory_space<smem>>
    %141 = vector.broadcast %140 : f32 to vector<8x128xf32>
    %142 = arith.mulf %141, %16 : vector<8x128xf32>
    %c4_66 = arith.constant 4 : index
    %c1_67 = arith.constant 1 : index
    %143 = memref.load %arg3[%c4_66, %c1_67] : memref<8x4xf32, #tpu.memory_space<smem>>
    %144 = vector.broadcast %143 : f32 to vector<8x128xf32>
    %145 = arith.mulf %144, %29 : vector<8x128xf32>
    %146 = arith.addf %142, %145 : vector<8x128xf32>
    %c4_68 = arith.constant 4 : index
    %c2_69 = arith.constant 2 : index
    %147 = memref.load %arg3[%c4_68, %c2_69] : memref<8x4xf32, #tpu.memory_space<smem>>
    %148 = vector.broadcast %147 : f32 to vector<8x128xf32>
    %149 = arith.mulf %148, %42 : vector<8x128xf32>
    %150 = arith.addf %146, %149 : vector<8x128xf32>
    %c4_70 = arith.constant 4 : index
    %c3_71 = arith.constant 3 : index
    %151 = memref.load %arg3[%c4_70, %c3_71] : memref<8x4xf32, #tpu.memory_space<smem>>
    %152 = vector.broadcast %151 : f32 to vector<8x128xf32>
    %153 = arith.mulf %152, %55 : vector<8x128xf32>
    %154 = arith.addf %150, %153 : vector<8x128xf32>
    %c4_72 = arith.constant 4 : index
    %155 = memref.load %arg4[%c4_72] : memref<8xf32, #tpu.memory_space<smem>>
    %156 = vector.broadcast %155 : f32 to vector<8x128xf32>
    %157 = arith.addf %154, %156 : vector<8x128xf32>
    %cst_73 = arith.constant 0.00999999977 : f32
    %158 = vector.broadcast %cst_73 : f32 to vector<8x128xf32>
    %159 = arith.mulf %158, %157 : vector<8x128xf32>
    %160 = arith.maximumf %157, %159 : vector<8x128xf32>
    %c5 = arith.constant 5 : index
    %c0_74 = arith.constant 0 : index
    %161 = memref.load %arg3[%c5, %c0_74] : memref<8x4xf32, #tpu.memory_space<smem>>
    %162 = vector.broadcast %161 : f32 to vector<8x128xf32>
    %163 = arith.mulf %162, %16 : vector<8x128xf32>
    %c5_75 = arith.constant 5 : index
    %c1_76 = arith.constant 1 : index
    %164 = memref.load %arg3[%c5_75, %c1_76] : memref<8x4xf32, #tpu.memory_space<smem>>
    %165 = vector.broadcast %164 : f32 to vector<8x128xf32>
    %166 = arith.mulf %165, %29 : vector<8x128xf32>
    %167 = arith.addf %163, %166 : vector<8x128xf32>
    %c5_77 = arith.constant 5 : index
    %c2_78 = arith.constant 2 : index
    %168 = memref.load %arg3[%c5_77, %c2_78] : memref<8x4xf32, #tpu.memory_space<smem>>
    %169 = vector.broadcast %168 : f32 to vector<8x128xf32>
    %170 = arith.mulf %169, %42 : vector<8x128xf32>
    %171 = arith.addf %167, %170 : vector<8x128xf32>
    %c5_79 = arith.constant 5 : index
    %c3_80 = arith.constant 3 : index
    %172 = memref.load %arg3[%c5_79, %c3_80] : memref<8x4xf32, #tpu.memory_space<smem>>
    %173 = vector.broadcast %172 : f32 to vector<8x128xf32>
    %174 = arith.mulf %173, %55 : vector<8x128xf32>
    %175 = arith.addf %171, %174 : vector<8x128xf32>
    %c5_81 = arith.constant 5 : index
    %176 = memref.load %arg4[%c5_81] : memref<8xf32, #tpu.memory_space<smem>>
    %177 = vector.broadcast %176 : f32 to vector<8x128xf32>
    %178 = arith.addf %175, %177 : vector<8x128xf32>
    %cst_82 = arith.constant 0.00999999977 : f32
    %179 = vector.broadcast %cst_82 : f32 to vector<8x128xf32>
    %180 = arith.mulf %179, %178 : vector<8x128xf32>
    %181 = arith.maximumf %178, %180 : vector<8x128xf32>
    %c6 = arith.constant 6 : index
    %c0_83 = arith.constant 0 : index
    %182 = memref.load %arg3[%c6, %c0_83] : memref<8x4xf32, #tpu.memory_space<smem>>
    %183 = vector.broadcast %182 : f32 to vector<8x128xf32>
    %184 = arith.mulf %183, %16 : vector<8x128xf32>
    %c6_84 = arith.constant 6 : index
    %c1_85 = arith.constant 1 : index
    %185 = memref.load %arg3[%c6_84, %c1_85] : memref<8x4xf32, #tpu.memory_space<smem>>
    %186 = vector.broadcast %185 : f32 to vector<8x128xf32>
    %187 = arith.mulf %186, %29 : vector<8x128xf32>
    %188 = arith.addf %184, %187 : vector<8x128xf32>
    %c6_86 = arith.constant 6 : index
    %c2_87 = arith.constant 2 : index
    %189 = memref.load %arg3[%c6_86, %c2_87] : memref<8x4xf32, #tpu.memory_space<smem>>
    %190 = vector.broadcast %189 : f32 to vector<8x128xf32>
    %191 = arith.mulf %190, %42 : vector<8x128xf32>
    %192 = arith.addf %188, %191 : vector<8x128xf32>
    %c6_88 = arith.constant 6 : index
    %c3_89 = arith.constant 3 : index
    %193 = memref.load %arg3[%c6_88, %c3_89] : memref<8x4xf32, #tpu.memory_space<smem>>
    %194 = vector.broadcast %193 : f32 to vector<8x128xf32>
    %195 = arith.mulf %194, %55 : vector<8x128xf32>
    %196 = arith.addf %192, %195 : vector<8x128xf32>
    %c6_90 = arith.constant 6 : index
    %197 = memref.load %arg4[%c6_90] : memref<8xf32, #tpu.memory_space<smem>>
    %198 = vector.broadcast %197 : f32 to vector<8x128xf32>
    %199 = arith.addf %196, %198 : vector<8x128xf32>
    %cst_91 = arith.constant 0.00999999977 : f32
    %200 = vector.broadcast %cst_91 : f32 to vector<8x128xf32>
    %201 = arith.mulf %200, %199 : vector<8x128xf32>
    %202 = arith.maximumf %199, %201 : vector<8x128xf32>
    %c7 = arith.constant 7 : index
    %c0_92 = arith.constant 0 : index
    %203 = memref.load %arg3[%c7, %c0_92] : memref<8x4xf32, #tpu.memory_space<smem>>
    %204 = vector.broadcast %203 : f32 to vector<8x128xf32>
    %205 = arith.mulf %204, %16 : vector<8x128xf32>
    %c7_93 = arith.constant 7 : index
    %c1_94 = arith.constant 1 : index
    %206 = memref.load %arg3[%c7_93, %c1_94] : memref<8x4xf32, #tpu.memory_space<smem>>
    %207 = vector.broadcast %206 : f32 to vector<8x128xf32>
    %208 = arith.mulf %207, %29 : vector<8x128xf32>
    %209 = arith.addf %205, %208 : vector<8x128xf32>
    %c7_95 = arith.constant 7 : index
    %c2_96 = arith.constant 2 : index
    %210 = memref.load %arg3[%c7_95, %c2_96] : memref<8x4xf32, #tpu.memory_space<smem>>
    %211 = vector.broadcast %210 : f32 to vector<8x128xf32>
    %212 = arith.mulf %211, %42 : vector<8x128xf32>
    %213 = arith.addf %209, %212 : vector<8x128xf32>
    %c7_97 = arith.constant 7 : index
    %c3_98 = arith.constant 3 : index
    %214 = memref.load %arg3[%c7_97, %c3_98] : memref<8x4xf32, #tpu.memory_space<smem>>
    %215 = vector.broadcast %214 : f32 to vector<8x128xf32>
    %216 = arith.mulf %215, %55 : vector<8x128xf32>
    %217 = arith.addf %213, %216 : vector<8x128xf32>
    %c7_99 = arith.constant 7 : index
    %218 = memref.load %arg4[%c7_99] : memref<8xf32, #tpu.memory_space<smem>>
    %219 = vector.broadcast %218 : f32 to vector<8x128xf32>
    %220 = arith.addf %217, %219 : vector<8x128xf32>
    %cst_100 = arith.constant 0.00999999977 : f32
    %221 = vector.broadcast %cst_100 : f32 to vector<8x128xf32>
    %222 = arith.mulf %221, %220 : vector<8x128xf32>
    %223 = arith.maximumf %220, %222 : vector<8x128xf32>
    %c0_101 = arith.constant 0 : index
    %c0_102 = arith.constant 0 : index
    %224 = memref.load %arg5[%c0_101, %c0_102] : memref<4x8xf32, #tpu.memory_space<smem>>
    %225 = vector.broadcast %224 : f32 to vector<8x128xf32>
    %226 = arith.mulf %225, %76 : vector<8x128xf32>
    %c0_103 = arith.constant 0 : index
    %c1_104 = arith.constant 1 : index
    %227 = memref.load %arg5[%c0_103, %c1_104] : memref<4x8xf32, #tpu.memory_space<smem>>
    %228 = vector.broadcast %227 : f32 to vector<8x128xf32>
    %229 = arith.mulf %228, %97 : vector<8x128xf32>
    %230 = arith.addf %226, %229 : vector<8x128xf32>
    %c0_105 = arith.constant 0 : index
    %c2_106 = arith.constant 2 : index
    %231 = memref.load %arg5[%c0_105, %c2_106] : memref<4x8xf32, #tpu.memory_space<smem>>
    %232 = vector.broadcast %231 : f32 to vector<8x128xf32>
    %233 = arith.mulf %232, %118 : vector<8x128xf32>
    %234 = arith.addf %230, %233 : vector<8x128xf32>
    %c0_107 = arith.constant 0 : index
    %c3_108 = arith.constant 3 : index
    %235 = memref.load %arg5[%c0_107, %c3_108] : memref<4x8xf32, #tpu.memory_space<smem>>
    %236 = vector.broadcast %235 : f32 to vector<8x128xf32>
    %237 = arith.mulf %236, %139 : vector<8x128xf32>
    %238 = arith.addf %234, %237 : vector<8x128xf32>
    %c0_109 = arith.constant 0 : index
    %c4_110 = arith.constant 4 : index
    %239 = memref.load %arg5[%c0_109, %c4_110] : memref<4x8xf32, #tpu.memory_space<smem>>
    %240 = vector.broadcast %239 : f32 to vector<8x128xf32>
    %241 = arith.mulf %240, %160 : vector<8x128xf32>
    %242 = arith.addf %238, %241 : vector<8x128xf32>
    %c0_111 = arith.constant 0 : index
    %c5_112 = arith.constant 5 : index
    %243 = memref.load %arg5[%c0_111, %c5_112] : memref<4x8xf32, #tpu.memory_space<smem>>
    %244 = vector.broadcast %243 : f32 to vector<8x128xf32>
    %245 = arith.mulf %244, %181 : vector<8x128xf32>
    %246 = arith.addf %242, %245 : vector<8x128xf32>
    %c0_113 = arith.constant 0 : index
    %c6_114 = arith.constant 6 : index
    %247 = memref.load %arg5[%c0_113, %c6_114] : memref<4x8xf32, #tpu.memory_space<smem>>
    %248 = vector.broadcast %247 : f32 to vector<8x128xf32>
    %249 = arith.mulf %248, %202 : vector<8x128xf32>
    %250 = arith.addf %246, %249 : vector<8x128xf32>
    %c0_115 = arith.constant 0 : index
    %c7_116 = arith.constant 7 : index
    %251 = memref.load %arg5[%c0_115, %c7_116] : memref<4x8xf32, #tpu.memory_space<smem>>
    %252 = vector.broadcast %251 : f32 to vector<8x128xf32>
    %253 = arith.mulf %252, %223 : vector<8x128xf32>
    %254 = arith.addf %250, %253 : vector<8x128xf32>
    %c0_117 = arith.constant 0 : index
    %255 = memref.load %arg6[%c0_117] : memref<4xf32, #tpu.memory_space<smem>>
    %256 = vector.broadcast %255 : f32 to vector<8x128xf32>
    %257 = arith.addf %254, %256 : vector<8x128xf32>
    %cst_118 = arith.constant 0.00999999977 : f32
    %258 = vector.broadcast %cst_118 : f32 to vector<8x128xf32>
    %259 = arith.mulf %258, %257 : vector<8x128xf32>
    %260 = arith.maximumf %257, %259 : vector<8x128xf32>
    %c1_119 = arith.constant 1 : index
    %c0_120 = arith.constant 0 : index
    %261 = memref.load %arg5[%c1_119, %c0_120] : memref<4x8xf32, #tpu.memory_space<smem>>
    %262 = vector.broadcast %261 : f32 to vector<8x128xf32>
    %263 = arith.mulf %262, %76 : vector<8x128xf32>
    %c1_121 = arith.constant 1 : index
    %c1_122 = arith.constant 1 : index
    %264 = memref.load %arg5[%c1_121, %c1_122] : memref<4x8xf32, #tpu.memory_space<smem>>
    %265 = vector.broadcast %264 : f32 to vector<8x128xf32>
    %266 = arith.mulf %265, %97 : vector<8x128xf32>
    %267 = arith.addf %263, %266 : vector<8x128xf32>
    %c1_123 = arith.constant 1 : index
    %c2_124 = arith.constant 2 : index
    %268 = memref.load %arg5[%c1_123, %c2_124] : memref<4x8xf32, #tpu.memory_space<smem>>
    %269 = vector.broadcast %268 : f32 to vector<8x128xf32>
    %270 = arith.mulf %269, %118 : vector<8x128xf32>
    %271 = arith.addf %267, %270 : vector<8x128xf32>
    %c1_125 = arith.constant 1 : index
    %c3_126 = arith.constant 3 : index
    %272 = memref.load %arg5[%c1_125, %c3_126] : memref<4x8xf32, #tpu.memory_space<smem>>
    %273 = vector.broadcast %272 : f32 to vector<8x128xf32>
    %274 = arith.mulf %273, %139 : vector<8x128xf32>
    %275 = arith.addf %271, %274 : vector<8x128xf32>
    %c1_127 = arith.constant 1 : index
    %c4_128 = arith.constant 4 : index
    %276 = memref.load %arg5[%c1_127, %c4_128] : memref<4x8xf32, #tpu.memory_space<smem>>
    %277 = vector.broadcast %276 : f32 to vector<8x128xf32>
    %278 = arith.mulf %277, %160 : vector<8x128xf32>
    %279 = arith.addf %275, %278 : vector<8x128xf32>
    %c1_129 = arith.constant 1 : index
    %c5_130 = arith.constant 5 : index
    %280 = memref.load %arg5[%c1_129, %c5_130] : memref<4x8xf32, #tpu.memory_space<smem>>
    %281 = vector.broadcast %280 : f32 to vector<8x128xf32>
    %282 = arith.mulf %281, %181 : vector<8x128xf32>
    %283 = arith.addf %279, %282 : vector<8x128xf32>
    %c1_131 = arith.constant 1 : index
    %c6_132 = arith.constant 6 : index
    %284 = memref.load %arg5[%c1_131, %c6_132] : memref<4x8xf32, #tpu.memory_space<smem>>
    %285 = vector.broadcast %284 : f32 to vector<8x128xf32>
    %286 = arith.mulf %285, %202 : vector<8x128xf32>
    %287 = arith.addf %283, %286 : vector<8x128xf32>
    %c1_133 = arith.constant 1 : index
    %c7_134 = arith.constant 7 : index
    %288 = memref.load %arg5[%c1_133, %c7_134] : memref<4x8xf32, #tpu.memory_space<smem>>
    %289 = vector.broadcast %288 : f32 to vector<8x128xf32>
    %290 = arith.mulf %289, %223 : vector<8x128xf32>
    %291 = arith.addf %287, %290 : vector<8x128xf32>
    %c1_135 = arith.constant 1 : index
    %292 = memref.load %arg6[%c1_135] : memref<4xf32, #tpu.memory_space<smem>>
    %293 = vector.broadcast %292 : f32 to vector<8x128xf32>
    %294 = arith.addf %291, %293 : vector<8x128xf32>
    %cst_136 = arith.constant 0.00999999977 : f32
    %295 = vector.broadcast %cst_136 : f32 to vector<8x128xf32>
    %296 = arith.mulf %295, %294 : vector<8x128xf32>
    %297 = arith.maximumf %294, %296 : vector<8x128xf32>
    %c2_137 = arith.constant 2 : index
    %c0_138 = arith.constant 0 : index
    %298 = memref.load %arg5[%c2_137, %c0_138] : memref<4x8xf32, #tpu.memory_space<smem>>
    %299 = vector.broadcast %298 : f32 to vector<8x128xf32>
    %300 = arith.mulf %299, %76 : vector<8x128xf32>
    %c2_139 = arith.constant 2 : index
    %c1_140 = arith.constant 1 : index
    %301 = memref.load %arg5[%c2_139, %c1_140] : memref<4x8xf32, #tpu.memory_space<smem>>
    %302 = vector.broadcast %301 : f32 to vector<8x128xf32>
    %303 = arith.mulf %302, %97 : vector<8x128xf32>
    %304 = arith.addf %300, %303 : vector<8x128xf32>
    %c2_141 = arith.constant 2 : index
    %c2_142 = arith.constant 2 : index
    %305 = memref.load %arg5[%c2_141, %c2_142] : memref<4x8xf32, #tpu.memory_space<smem>>
    %306 = vector.broadcast %305 : f32 to vector<8x128xf32>
    %307 = arith.mulf %306, %118 : vector<8x128xf32>
    %308 = arith.addf %304, %307 : vector<8x128xf32>
    %c2_143 = arith.constant 2 : index
    %c3_144 = arith.constant 3 : index
    %309 = memref.load %arg5[%c2_143, %c3_144] : memref<4x8xf32, #tpu.memory_space<smem>>
    %310 = vector.broadcast %309 : f32 to vector<8x128xf32>
    %311 = arith.mulf %310, %139 : vector<8x128xf32>
    %312 = arith.addf %308, %311 : vector<8x128xf32>
    %c2_145 = arith.constant 2 : index
    %c4_146 = arith.constant 4 : index
    %313 = memref.load %arg5[%c2_145, %c4_146] : memref<4x8xf32, #tpu.memory_space<smem>>
    %314 = vector.broadcast %313 : f32 to vector<8x128xf32>
    %315 = arith.mulf %314, %160 : vector<8x128xf32>
    %316 = arith.addf %312, %315 : vector<8x128xf32>
    %c2_147 = arith.constant 2 : index
    %c5_148 = arith.constant 5 : index
    %317 = memref.load %arg5[%c2_147, %c5_148] : memref<4x8xf32, #tpu.memory_space<smem>>
    %318 = vector.broadcast %317 : f32 to vector<8x128xf32>
    %319 = arith.mulf %318, %181 : vector<8x128xf32>
    %320 = arith.addf %316, %319 : vector<8x128xf32>
    %c2_149 = arith.constant 2 : index
    %c6_150 = arith.constant 6 : index
    %321 = memref.load %arg5[%c2_149, %c6_150] : memref<4x8xf32, #tpu.memory_space<smem>>
    %322 = vector.broadcast %321 : f32 to vector<8x128xf32>
    %323 = arith.mulf %322, %202 : vector<8x128xf32>
    %324 = arith.addf %320, %323 : vector<8x128xf32>
    %c2_151 = arith.constant 2 : index
    %c7_152 = arith.constant 7 : index
    %325 = memref.load %arg5[%c2_151, %c7_152] : memref<4x8xf32, #tpu.memory_space<smem>>
    %326 = vector.broadcast %325 : f32 to vector<8x128xf32>
    %327 = arith.mulf %326, %223 : vector<8x128xf32>
    %328 = arith.addf %324, %327 : vector<8x128xf32>
    %c2_153 = arith.constant 2 : index
    %329 = memref.load %arg6[%c2_153] : memref<4xf32, #tpu.memory_space<smem>>
    %330 = vector.broadcast %329 : f32 to vector<8x128xf32>
    %331 = arith.addf %328, %330 : vector<8x128xf32>
    %cst_154 = arith.constant 0.00999999977 : f32
    %332 = vector.broadcast %cst_154 : f32 to vector<8x128xf32>
    %333 = arith.mulf %332, %331 : vector<8x128xf32>
    %334 = arith.maximumf %331, %333 : vector<8x128xf32>
    %c3_155 = arith.constant 3 : index
    %c0_156 = arith.constant 0 : index
    %335 = memref.load %arg5[%c3_155, %c0_156] : memref<4x8xf32, #tpu.memory_space<smem>>
    %336 = vector.broadcast %335 : f32 to vector<8x128xf32>
    %337 = arith.mulf %336, %76 : vector<8x128xf32>
    %c3_157 = arith.constant 3 : index
    %c1_158 = arith.constant 1 : index
    %338 = memref.load %arg5[%c3_157, %c1_158] : memref<4x8xf32, #tpu.memory_space<smem>>
    %339 = vector.broadcast %338 : f32 to vector<8x128xf32>
    %340 = arith.mulf %339, %97 : vector<8x128xf32>
    %341 = arith.addf %337, %340 : vector<8x128xf32>
    %c3_159 = arith.constant 3 : index
    %c2_160 = arith.constant 2 : index
    %342 = memref.load %arg5[%c3_159, %c2_160] : memref<4x8xf32, #tpu.memory_space<smem>>
    %343 = vector.broadcast %342 : f32 to vector<8x128xf32>
    %344 = arith.mulf %343, %118 : vector<8x128xf32>
    %345 = arith.addf %341, %344 : vector<8x128xf32>
    %c3_161 = arith.constant 3 : index
    %c3_162 = arith.constant 3 : index
    %346 = memref.load %arg5[%c3_161, %c3_162] : memref<4x8xf32, #tpu.memory_space<smem>>
    %347 = vector.broadcast %346 : f32 to vector<8x128xf32>
    %348 = arith.mulf %347, %139 : vector<8x128xf32>
    %349 = arith.addf %345, %348 : vector<8x128xf32>
    %c3_163 = arith.constant 3 : index
    %c4_164 = arith.constant 4 : index
    %350 = memref.load %arg5[%c3_163, %c4_164] : memref<4x8xf32, #tpu.memory_space<smem>>
    %351 = vector.broadcast %350 : f32 to vector<8x128xf32>
    %352 = arith.mulf %351, %160 : vector<8x128xf32>
    %353 = arith.addf %349, %352 : vector<8x128xf32>
    %c3_165 = arith.constant 3 : index
    %c5_166 = arith.constant 5 : index
    %354 = memref.load %arg5[%c3_165, %c5_166] : memref<4x8xf32, #tpu.memory_space<smem>>
    %355 = vector.broadcast %354 : f32 to vector<8x128xf32>
    %356 = arith.mulf %355, %181 : vector<8x128xf32>
    %357 = arith.addf %353, %356 : vector<8x128xf32>
    %c3_167 = arith.constant 3 : index
    %c6_168 = arith.constant 6 : index
    %358 = memref.load %arg5[%c3_167, %c6_168] : memref<4x8xf32, #tpu.memory_space<smem>>
    %359 = vector.broadcast %358 : f32 to vector<8x128xf32>
    %360 = arith.mulf %359, %202 : vector<8x128xf32>
    %361 = arith.addf %357, %360 : vector<8x128xf32>
    %c3_169 = arith.constant 3 : index
    %c7_170 = arith.constant 7 : index
    %362 = memref.load %arg5[%c3_169, %c7_170] : memref<4x8xf32, #tpu.memory_space<smem>>
    %363 = vector.broadcast %362 : f32 to vector<8x128xf32>
    %364 = arith.mulf %363, %223 : vector<8x128xf32>
    %365 = arith.addf %361, %364 : vector<8x128xf32>
    %c3_171 = arith.constant 3 : index
    %366 = memref.load %arg6[%c3_171] : memref<4xf32, #tpu.memory_space<smem>>
    %367 = vector.broadcast %366 : f32 to vector<8x128xf32>
    %368 = arith.addf %365, %367 : vector<8x128xf32>
    %cst_172 = arith.constant 0.00999999977 : f32
    %369 = vector.broadcast %cst_172 : f32 to vector<8x128xf32>
    %370 = arith.mulf %369, %368 : vector<8x128xf32>
    %371 = arith.maximumf %368, %370 : vector<8x128xf32>
    %c0_173 = arith.constant 0 : index
    %c0_174 = arith.constant 0 : index
    %372 = memref.load %arg7[%c0_173, %c0_174] : memref<1x4xf32, #tpu.memory_space<smem>>
    %373 = vector.broadcast %372 : f32 to vector<8x128xf32>
    %374 = arith.mulf %373, %260 : vector<8x128xf32>
    %c0_175 = arith.constant 0 : index
    %c1_176 = arith.constant 1 : index
    %375 = memref.load %arg7[%c0_175, %c1_176] : memref<1x4xf32, #tpu.memory_space<smem>>
    %376 = vector.broadcast %375 : f32 to vector<8x128xf32>
    %377 = arith.mulf %376, %297 : vector<8x128xf32>
    %378 = arith.addf %374, %377 : vector<8x128xf32>
    %c0_177 = arith.constant 0 : index
    %c2_178 = arith.constant 2 : index
    %379 = memref.load %arg7[%c0_177, %c2_178] : memref<1x4xf32, #tpu.memory_space<smem>>
    %380 = vector.broadcast %379 : f32 to vector<8x128xf32>
    %381 = arith.mulf %380, %334 : vector<8x128xf32>
    %382 = arith.addf %378, %381 : vector<8x128xf32>
    %c0_179 = arith.constant 0 : index
    %c3_180 = arith.constant 3 : index
    %383 = memref.load %arg7[%c0_179, %c3_180] : memref<1x4xf32, #tpu.memory_space<smem>>
    %384 = vector.broadcast %383 : f32 to vector<8x128xf32>
    %385 = arith.mulf %384, %371 : vector<8x128xf32>
    %386 = arith.addf %382, %385 : vector<8x128xf32>
    %c0_181 = arith.constant 0 : index
    %387 = memref.load %arg8[%c0_181] : memref<1xf32, #tpu.memory_space<smem>>
    %388 = vector.broadcast %387 : f32 to vector<8x128xf32>
    %389 = arith.addf %386, %388 : vector<8x128xf32>
    %390 = math.tanh %389 : vector<8x128xf32>
    %c0_182 = arith.constant 0 : index
    %c0_183 = arith.constant 0 : index
    %391 = vector.load %arg10[%c0_182, %c0_183] : memref<8x128xf32, #tpu.memory_space<vmem>>, vector<8x128xf32>
    tpu.vector_store %arg10[%c0_182, %c0_183], %390 {strides = array<i32>} : memref<8x128xf32, #tpu.memory_space<vmem>>, vector<8x128xf32>,
    return
  }
  func.func @transform_0(%arg0: i32) -> (i32, i32) {
    %c0_i32 = arith.constant 0 : i32
    %c0_i32_0 = arith.constant 0 : i32
    %c0_i32_1 = arith.constant 0 : i32
    return %c0_i32, %c0_i32_0 : i32, i32
  }
  func.func @transform_1(%arg0: i32) -> i32 {
    %c0_i32 = arith.constant 0 : i32
    %c0_i32_0 = arith.constant 0 : i32
    return %c0_i32 : i32
  }
  func.func @transform_2(%arg0: i32) -> (i32, i32) {
    %c0_i32 = arith.constant 0 : i32
    %c0_i32_0 = arith.constant 0 : i32
    %c0_i32_1 = arith.constant 0 : i32
    return %c0_i32, %c0_i32_0 : i32, i32
  }
  func.func @transform_3(%arg0: i32) -> i32 {
    %c0_i32 = arith.constant 0 : i32
    %c0_i32_0 = arith.constant 0 : i32
    return %c0_i32 : i32
  }
  func.func @transform_4(%arg0: i32) -> (i32, i32) {
    %c0_i32 = arith.constant 0 : i32
    %c0_i32_0 = arith.constant 0 : i32
    %c0_i32_1 = arith.constant 0 : i32
    return %c0_i32, %c0_i32_0 : i32, i32
  }
  func.func @transform_5(%arg0: i32) -> i32 {
    %c0_i32 = arith.constant 0 : i32
    %c0_i32_0 = arith.constant 0 : i32
    return %c0_i32 : i32
  }
  func.func @transform_6(%arg0: i32) -> (i32, i32) {
    %c0_i32 = arith.constant 0 : i32
    %c0_i32_0 = arith.constant 0 : i32
    %c0_i32_1 = arith.constant 0 : i32
    return %c0_i32, %c0_i32_0 : i32, i32
  }
  func.func @transform_7(%arg0: i32) -> i32 {
    %c0_i32 = arith.constant 0 : i32
    %c0_i32_0 = arith.constant 0 : i32
    return %c0_i32 : i32
  }
  func.func @transform_8(%arg0: i32) -> (i32, i32, i32) {
    %c0_i32 = arith.constant 0 : i32
    %c0_i32_0 = arith.constant 0 : i32
    %c0_i32_1 = arith.constant 0 : i32
    return %c0_i32, %arg0, %c0_i32_0 : i32, i32, i32
  }
  func.func @transform_9(%arg0: i32) -> (i32, i32) {
    %c0_i32 = arith.constant 0 : i32
    %c0_i32_0 = arith.constant 0 : i32
    return %arg0, %c0_i32 : i32, i32
  }
}

</mosaic_0001>

<llo_original>
// kernel: net_forward.1
$region0: #{net_forward.1}
  #allocation0 [shape = 'u32[]', space=smem, size = 0x4, offset = 0x4, fixed_abs, tag = 'smem constant byte address 0x4 - core index']
  #allocation1 [shape = 'u32[72,128]{1,0:T(1,128)}', space=vmem, size = 0x9000, scoped, tag = 'internal scratch']
  #allocation2 [shape = 'f32[1]{0:T(128)S(6)}', space=smem, size = 0x200, scoped, tag = 'scoped memory for net_forward.1']
  %s0 = inlined_call_operand.vmem [shape: f32[4,2], index: 0, kind: input, shape index: {}]
  %s1 = inlined_call_operand.vmem [shape: f32[4], index: 1, kind: input, shape index: {}]
  %s2 = inlined_call_operand.vmem [shape: f32[8,4], index: 2, kind: input, shape index: {}]
  %s3 = inlined_call_operand.vmem [shape: f32[8], index: 3, kind: input, shape index: {}]
  %s4 = inlined_call_operand.vmem [shape: f32[4,8], index: 4, kind: input, shape index: {}]
  %s5 = inlined_call_operand.vmem [shape: f32[4], index: 5, kind: input, shape index: {}]
  %s6 = inlined_call_operand.vmem [shape: f32[1,4], index: 6, kind: input, shape index: {}]
  %s7 = inlined_call_operand.<no memory space> [shape: f32[1], index: 7, kind: input, shape index: {}]
  %s8 = inlined_call_operand.vmem [shape: f32[2,8,128], index: 8, kind: input, shape index: {}]
  %s9 = inlined_call_operand.vmem [shape: f32[8,128], index: 9, kind: output, shape index: {}]
  %s10 = sld [smem:[#allocation0]]
  $region74: #{net_forward.1} parent=0
    _
  %s12 = ssub.s32 1, %s10
  %s13 = scalar_select 0, %s12, %s10
  %14 = sst [smem:[#allocation2]] %s7
  $region1: #{net_forward.1} parent=0
    #allocation3 [shape = 'u8[2048]{0}', space=smem, size = 0x800, scoped, tag = 'input window, operand 0, single buffered']
    #allocation4 [shape = 's32[1]{0}', space=sflag, size = 0x4, scoped, tag = 'scoped memory for net_forward.1']
    #allocation5 [shape = 'u8[512]{0}', space=smem, size = 0x200, scoped, tag = 'input window, operand 1, single buffered']
    #allocation6 [shape = 's32[1]{0}', space=sflag, size = 0x4, scoped, tag = 'scoped memory for net_forward.1']
    #allocation7 [shape = 'u8[4096]{0}', space=smem, size = 0x1000, scoped, tag = 'input window, operand 2, single buffered']
    #allocation8 [shape = 'u8[512]{0}', space=smem, size = 0x200, scoped, tag = 'input window, operand 3, single buffered']
    #allocation9 [shape = 's32[1]{0}', space=sflag, size = 0x4, scoped, tag = 'scoped memory for net_forward.1']
    #allocation10 [shape = 'u8[2048]{0}', space=smem, size = 0x800, scoped, tag = 'input window, operand 4, single buffered']
    #allocation11 [shape = 'u8[512]{0}', space=smem, size = 0x200, scoped, tag = 'input window, operand 5, single buffered']
    #allocation12 [shape = 's32[1]{0}', space=sflag, size = 0x4, scoped, tag = 'scoped memory for net_forward.1']
    #allocation13 [shape = 'u8[512]{0}', space=smem, size = 0x200, scoped, tag = 'input window, operand 6, single buffered']
    %15 = vsyncpa [#allocation4], 0
    %16 = vsyncpa [#allocation6], 0
    %17 = vsyncpa [#allocation9], 0
    %18 = vsyncpa [#allocation12], 0
    // Predicated region
    $region2: #{net_forward.1} parent=1 // pred_check
      _
    $region3: #{net_forward.1} parent=1 // pred_check_branch
      %20 = sbr.rel (0) target = $region5
    $region4: #{net_forward.1} parent=1 // pred_region
      %22 = vsyncadd [#allocation4], 0
      %s24 = sshll.u32 %s0, 4
      %s25 = int_to_ptr.vmem [resolvable:$true] %s24
      %27 = dma.vmem_to_smem %s25, 64, [#allocation3], [#allocation4]
    $region5: #{net_forward.1} parent=1 // pred_fallthru
      _
    // Predicated region
    $region6: #{net_forward.1} parent=1 // pred_check
      _
    $region7: #{net_forward.1} parent=1 // pred_check_branch
      %29 = sbr.rel (0) target = $region9
    $region8: #{net_forward.1} parent=1 // pred_region
      %31 = vsyncadd [#allocation6], 0
      %s33 = sshll.u32 %s1, 4
      %s34 = int_to_ptr.vmem [resolvable:$true] %s33
      %36 = dma.vmem_to_smem %s34, 16, [#allocation5], [#allocation6]
    $region9: #{net_forward.1} parent=1 // pred_fallthru
      _
    // Predicated region
    $region10: #{net_forward.1} parent=1 // pred_check
      _
    $region11: #{net_forward.1} parent=1 // pred_check_branch
      %38 = sbr.rel (0) target = $region13
    $region12: #{net_forward.1} parent=1 // pred_region
      %40 = vsyncadd [#allocation6], 0
      %s42 = sshll.u32 %s2, 4
      %s43 = int_to_ptr.vmem [resolvable:$true] %s42
      %45 = dma.vmem_to_smem %s43, 128, [#allocation7], [#allocation6]
    $region13: #{net_forward.1} parent=1 // pred_fallthru
      _
    // Predicated region
    $region14: #{net_forward.1} parent=1 // pred_check
      _
    $region15: #{net_forward.1} parent=1 // pred_check_branch
      %47 = sbr.rel (0) target = $region17
    $region16: #{net_forward.1} parent=1 // pred_region
      %49 = vsyncadd [#allocation9], 0
      %s51 = sshll.u32 %s3, 4
      %s52 = int_to_ptr.vmem [resolvable:$true] %s51
      %54 = dma.vmem_to_smem %s52, 16, [#allocation8], [#allocation9]
    $region17: #{net_forward.1} parent=1 // pred_fallthru
      _
    // Predicated region
    $region18: #{net_forward.1} parent=1 // pred_check
      _
    $region19: #{net_forward.1} parent=1 // pred_check_branch
      %56 = sbr.rel (0) target = $region21
    $region20: #{net_forward.1} parent=1 // pred_region
      %58 = vsyncadd [#allocation9], 0
      %s60 = sshll.u32 %s4, 4
      %s61 = int_to_ptr.vmem [resolvable:$true] %s60
      %63 = dma.vmem_to_smem %s61, 64, [#allocation10], [#allocation9]
    $region21: #{net_forward.1} parent=1 // pred_fallthru
      _
    // Predicated region
    $region22: #{net_forward.1} parent=1 // pred_check
      _
    $region23: #{net_forward.1} parent=1 // pred_check_branch
      %65 = sbr.rel (0) target = $region25
    $region24: #{net_forward.1} parent=1 // pred_region
      %67 = vsyncadd [#allocation12], 0
      %s69 = sshll.u32 %s5, 4
      %s70 = int_to_ptr.vmem [resolvable:$true] %s69
      %72 = dma.vmem_to_smem %s70, 16, [#allocation11], [#allocation12]
    $region25: #{net_forward.1} parent=1 // pred_fallthru
      _
    // Predicated region
    $region26: #{net_forward.1} parent=1 // pred_check
      _
    $region27: #{net_forward.1} parent=1 // pred_check_branch
      %74 = sbr.rel (0) target = $region29
    $region28: #{net_forward.1} parent=1 // pred_region
      %76 = vsyncadd [#allocation12], 0
      %s78 = sshll.u32 %s6, 4
      %s79 = int_to_ptr.vmem [resolvable:$true] %s78
      %81 = dma.vmem_to_smem %s79, 16, [#allocation13], [#allocation12]
    $region29: #{net_forward.1} parent=1 // pred_fallthru
      _
    // Predicated region
    $region30: #{net_forward.1} parent=1 // pred_check
      _
    $region31: #{net_forward.1} parent=1 // pred_check_branch
      %83 = sbr.rel (0) target = $region33
    $region32: #{net_forward.1} parent=1 // pred_region
      _
    $region33: #{net_forward.1} parent=1 // pred_fallthru
      _
    // Predicated region
    $region34: #{net_forward.1} parent=1 // pred_check
      _
    $region35: #{net_forward.1} parent=1 // pred_check_branch
      %85 = sbr.rel (0) target = $region37
    $region36: #{net_forward.1} parent=1 // pred_region
      _
    $region37: #{net_forward.1} parent=1 // pred_fallthru
      _
    // Predicated region
    $region38: #{net_forward.1} parent=1 // pred_check
      _
    $region39: #{net_forward.1} parent=1 // pred_check_branch
      %87 = sbr.rel (0) target = $region41
    $region40: #{net_forward.1} parent=1 // pred_region
      %89 = dma.done [#allocation4], 64
    $region41: #{net_forward.1} parent=1 // pred_fallthru
      _
    // Predicated region
    $region42: #{net_forward.1} parent=1 // pred_check
      _
    $region43: #{net_forward.1} parent=1 // pred_check_branch
      %91 = sbr.rel (0) target = $region45
    $region44: #{net_forward.1} parent=1 // pred_region
      %93 = dma.done [#allocation6], 16
    $region45: #{net_forward.1} parent=1 // pred_fallthru
      _
    // Predicated region
    $region46: #{net_forward.1} parent=1 // pred_check
      _
    $region47: #{net_forward.1} parent=1 // pred_check_branch
      %95 = sbr.rel (0) target = $region49
    $region48: #{net_forward.1} parent=1 // pred_region
      %97 = dma.done [#allocation6], 128
    $region49: #{net_forward.1} parent=1 // pred_fallthru
      _
    // Predicated region
    $region50: #{net_forward.1} parent=1 // pred_check
      _
    $region51: #{net_forward.1} parent=1 // pred_check_branch
      %99 = sbr.rel (0) target = $region53
    $region52: #{net_forward.1} parent=1 // pred_region
      %101 = dma.done [#allocation9], 16
    $region53: #{net_forward.1} parent=1 // pred_fallthru
      _
    // Predicated region
    $region54: #{net_forward.1} parent=1 // pred_check
      _
    $region55: #{net_forward.1} parent=1 // pred_check_branch
      %103 = sbr.rel (0) target = $region57
    $region56: #{net_forward.1} parent=1 // pred_region
      %105 = dma.done [#allocation9], 64
    $region57: #{net_forward.1} parent=1 // pred_fallthru
      _
    // Predicated region
    $region58: #{net_forward.1} parent=1 // pred_check
      _
    $region59: #{net_forward.1} parent=1 // pred_check_branch
      %107 = sbr.rel (0) target = $region61
    $region60: #{net_forward.1} parent=1 // pred_region
      %109 = dma.done [#allocation12], 16
    $region61: #{net_forward.1} parent=1 // pred_fallthru
      _
    // Predicated region
    $region62: #{net_forward.1} parent=1 // pred_check
      _
    $region63: #{net_forward.1} parent=1 // pred_check_branch
      %111 = sbr.rel (0) target = $region65
    $region64: #{net_forward.1} parent=1 // pred_region
      %113 = dma.done [#allocation12], 16
    $region65: #{net_forward.1} parent=1 // pred_fallthru
      _
    %114 = sfence
    %v115 = vld [vmem:[%s8] sm:$0xff]
    %s116 = scalar_lea.vmem %s8, 8
    %v117 = vld [vmem:[%s116] sm:$0xff]
    %s118 = sld [smem:[#allocation3]]
    %v119 = vstv %s118
    %v120 = vmul.f32 %v119, %v115
    %s121 = sld [smem:[#allocation3 + $0x1]]
    %v122 = vstv %s121
    %v123 = vmul.f32 %v122, %v117
    %v124 = vadd.f32 %v120, %v123
    %s125 = sld [smem:[#allocation5]]
    %v126 = vstv %s125
    %v127 = vadd.f32 %v124, %v126
    %v128 = vmul.f32 %v127, 0.01
    %v129 = vmax.f32 %v127, %v128
    %s130 = sld [smem:[#allocation3 + $0x80]]
    %v131 = vstv %s130
    %v132 = vmul.f32 %v131, %v115
    %s133 = sld [smem:[#allocation3 + $0x81]]
    %v134 = vstv %s133
    %v135 = vmul.f32 %v134, %v117
    %v136 = vadd.f32 %v132, %v135
    %s137 = sld [smem:[#allocation5 + $0x1]]
    %v138 = vstv %s137
    %v139 = vadd.f32 %v136, %v138
    %v140 = vmul.f32 %v139, 0.01
    %v141 = vmax.f32 %v139, %v140
    %s142 = sld [smem:[#allocation3 + $0x100]]
    %v143 = vstv %s142
    %v144 = vmul.f32 %v143, %v115
    %s145 = sld [smem:[#allocation3 + $0x101]]
    %v146 = vstv %s145
    %v147 = vmul.f32 %v146, %v117
    %v148 = vadd.f32 %v144, %v147
    %s149 = sld [smem:[#allocation5 + $0x2]]
    %v150 = vstv %s149
    %v151 = vadd.f32 %v148, %v150
    %v152 = vmul.f32 %v151, 0.01
    %v153 = vmax.f32 %v151, %v152
    %s154 = sld [smem:[#allocation3 + $0x180]]
    %v155 = vstv %s154
    %v156 = vmul.f32 %v155, %v115
    %s157 = sld [smem:[#allocation3 + $0x181]]
    %v158 = vstv %s157
    %v159 = vmul.f32 %v158, %v117
    %v160 = vadd.f32 %v156, %v159
    %s161 = sld [smem:[#allocation5 + $0x3]]
    %v162 = vstv %s161
    %v163 = vadd.f32 %v160, %v162
    %v164 = vmul.f32 %v163, 0.01
    %v165 = vmax.f32 %v163, %v164
    %s166 = sld [smem:[#allocation7]]
    %v167 = vstv %s166
    %v168 = vmul.f32 %v167, %v129
    %s169 = sld [smem:[#allocation7 + $0x1]]
    %v170 = vstv %s169
    %v171 = vmul.f32 %v170, %v141
    %v172 = vadd.f32 %v168, %v171
    %s173 = sld [smem:[#allocation7 + $0x2]]
    %v174 = vstv %s173
    %v175 = vmul.f32 %v174, %v153
    %v176 = vadd.f32 %v172, %v175
    %s177 = sld [smem:[#allocation7 + $0x3]]
    %v178 = vstv %s177
    %v179 = vmul.f32 %v178, %v165
    %v180 = vadd.f32 %v176, %v179
    %s181 = sld [smem:[#allocation8]]
    %v182 = vstv %s181
    %v183 = vadd.f32 %v180, %v182
    %v184 = vmul.f32 %v183, 0.01
    %v185 = vmax.f32 %v183, %v184
    %s186 = sld [smem:[#allocation7 + $0x80]]
    %v187 = vstv %s186
    %v188 = vmul.f32 %v187, %v129
    %s189 = sld [smem:[#allocation7 + $0x81]]
    %v190 = vstv %s189
    %v191 = vmul.f32 %v190, %v141
    %v192 = vadd.f32 %v188, %v191
    %s193 = sld [smem:[#allocation7 + $0x82]]
    %v194 = vstv %s193
    %v195 = vmul.f32 %v194, %v153
    %v196 = vadd.f32 %v192, %v195
    %s197 = sld [smem:[#allocation7 + $0x83]]
    %v198 = vstv %s197
    %v199 = vmul.f32 %v198, %v165
    %v200 = vadd.f32 %v196, %v199
    %s201 = sld [smem:[#allocation8 + $0x1]]
    %v202 = vstv %s201
    %v203 = vadd.f32 %v200, %v202
    %v204 = vmul.f32 %v203, 0.01
    %v205 = vmax.f32 %v203, %v204
    %s206 = sld [smem:[#allocation7 + $0x100]]
    %v207 = vstv %s206
    %v208 = vmul.f32 %v207, %v129
    %s209 = sld [smem:[#allocation7 + $0x101]]
    %v210 = vstv %s209
    %v211 = vmul.f32 %v210, %v141
    %v212 = vadd.f32 %v208, %v211
    %s213 = sld [smem:[#allocation7 + $0x102]]
    %v214 = vstv %s213
    %v215 = vmul.f32 %v214, %v153
    %v216 = vadd.f32 %v212, %v215
    %s217 = sld [smem:[#allocation7 + $0x103]]
    %v218 = vstv %s217
    %v219 = vmul.f32 %v218, %v165
    %v220 = vadd.f32 %v216, %v219
    %s221 = sld [smem:[#allocation8 + $0x2]]
    %v222 = vstv %s221
    %v223 = vadd.f32 %v220, %v222
    %v224 = vmul.f32 %v223, 0.01
    %v225 = vmax.f32 %v223, %v224
    %s226 = sld [smem:[#allocation7 + $0x180]]
    %v227 = vstv %s226
    %v228 = vmul.f32 %v227, %v129
    %s229 = sld [smem:[#allocation7 + $0x181]]
    %v230 = vstv %s229
    %v231 = vmul.f32 %v230, %v141
    %v232 = vadd.f32 %v228, %v231
    %s233 = sld [smem:[#allocation7 + $0x182]]
    %v234 = vstv %s233
    %v235 = vmul.f32 %v234, %v153
    %v236 = vadd.f32 %v232, %v235
    %s237 = sld [smem:[#allocation7 + $0x183]]
    %v238 = vstv %s237
    %v239 = vmul.f32 %v238, %v165
    %v240 = vadd.f32 %v236, %v239
    %s241 = sld [smem:[#allocation8 + $0x3]]
    %v242 = vstv %s241
    %v243 = vadd.f32 %v240, %v242
    %v244 = vmul.f32 %v243, 0.01
    %v245 = vmax.f32 %v243, %v244
    %s246 = sld [smem:[#allocation7 + $0x200]]
    %v247 = vstv %s246
    %v248 = vmul.f32 %v247, %v129
    %s249 = sld [smem:[#allocation7 + $0x201]]
    %v250 = vstv %s249
    %v251 = vmul.f32 %v250, %v141
    %v252 = vadd.f32 %v248, %v251
    %s253 = sld [smem:[#allocation7 + $0x202]]
    %v254 = vstv %s253
    %v255 = vmul.f32 %v254, %v153
    %v256 = vadd.f32 %v252, %v255
    %s257 = sld [smem:[#allocation7 + $0x203]]
    %v258 = vstv %s257
    %v259 = vmul.f32 %v258, %v165
    %v260 = vadd.f32 %v256, %v259
    %s261 = sld [smem:[#allocation8 + $0x4]]
    %v262 = vstv %s261
    %v263 = vadd.f32 %v260, %v262
    %v264 = vmul.f32 %v263, 0.01
    %v265 = vmax.f32 %v263, %v264
    %s266 = sld [smem:[#allocation7 + $0x280]]
    %v267 = vstv %s266
    %v268 = vmul.f32 %v267, %v129
    %s269 = sld [smem:[#allocation7 + $0x281]]
    %v270 = vstv %s269
    %v271 = vmul.f32 %v270, %v141
    %v272 = vadd.f32 %v268, %v271
    %s273 = sld [smem:[#allocation7 + $0x282]]
    %v274 = vstv %s273
    %v275 = vmul.f32 %v274, %v153
    %v276 = vadd.f32 %v272, %v275
    %s277 = sld [smem:[#allocation7 + $0x283]]
    %v278 = vstv %s277
    %v279 = vmul.f32 %v278, %v165
    %v280 = vadd.f32 %v276, %v279
    %s281 = sld [smem:[#allocation8 + $0x5]]
    %v282 = vstv %s281
    %v283 = vadd.f32 %v280, %v282
    %v284 = vmul.f32 %v283, 0.01
    %v285 = vmax.f32 %v283, %v284
    %s286 = sld [smem:[#allocation7 + $0x300]]
    %v287 = vstv %s286
    %v288 = vmul.f32 %v287, %v129
    %s289 = sld [smem:[#allocation7 + $0x301]]
    %v290 = vstv %s289
    %v291 = vmul.f32 %v290, %v141
    %v292 = vadd.f32 %v288, %v291
    %s293 = sld [smem:[#allocation7 + $0x302]]
    %v294 = vstv %s293
    %v295 = vmul.f32 %v294, %v153
    %v296 = vadd.f32 %v292, %v295
    %s297 = sld [smem:[#allocation7 + $0x303]]
    %v298 = vstv %s297
    %v299 = vmul.f32 %v298, %v165
    %v300 = vadd.f32 %v296, %v299
    %s301 = sld [smem:[#allocation8 + $0x6]]
    %v302 = vstv %s301
    %v303 = vadd.f32 %v300, %v302
    %v304 = vmul.f32 %v303, 0.01
    %v305 = vmax.f32 %v303, %v304
    %s306 = sld [smem:[#allocation7 + $0x380]]
    %v307 = vstv %s306
    %v308 = vmul.f32 %v307, %v129
    %s309 = sld [smem:[#allocation7 + $0x381]]
    %v310 = vstv %s309
    %v311 = vmul.f32 %v310, %v141
    %v312 = vadd.f32 %v308, %v311
    %s313 = sld [smem:[#allocation7 + $0x382]]
    %v314 = vstv %s313
    %v315 = vmul.f32 %v314, %v153
    %v316 = vadd.f32 %v312, %v315
    %s317 = sld [smem:[#allocation7 + $0x383]]
    %v318 = vstv %s317
    %v319 = vmul.f32 %v318, %v165
    %v320 = vadd.f32 %v316, %v319
    %s321 = sld [smem:[#allocation8 + $0x7]]
    %v322 = vstv %s321
    %v323 = vadd.f32 %v320, %v322
    %v324 = vmul.f32 %v323, 0.01
    %v325 = vmax.f32 %v323, %v324
    %s326 = sld [smem:[#allocation10]]
    %v327 = vstv %s326
    %v328 = vmul.f32 %v327, %v185
    %s329 = sld [smem:[#allocation10 + $0x1]]
    %v330 = vstv %s329
    %v331 = vmul.f32 %v330, %v205
    %v332 = vadd.f32 %v328, %v331
    %s333 = sld [smem:[#allocation10 + $0x2]]
    %v334 = vstv %s333
    %v335 = vmul.f32 %v334, %v225
    %v336 = vadd.f32 %v332, %v335
    %s337 = sld [smem:[#allocation10 + $0x3]]
    %v338 = vstv %s337
    %v339 = vmul.f32 %v338, %v245
    %v340 = vadd.f32 %v336, %v339
    %s341 = sld [smem:[#allocation10 + $0x4]]
    %v342 = vstv %s341
    %v343 = vmul.f32 %v342, %v265
    %v344 = vadd.f32 %v340, %v343
    %s345 = sld [smem:[#allocation10 + $0x5]]
    %v346 = vstv %s345
    %v347 = vmul.f32 %v346, %v285
    %v348 = vadd.f32 %v344, %v347
    %s349 = sld [smem:[#allocation10 + $0x6]]
    %v350 = vstv %s349
    %v351 = vmul.f32 %v350, %v305
    %v352 = vadd.f32 %v348, %v351
    %s353 = sld [smem:[#allocation10 + $0x7]]
    %v354 = vstv %s353
    %v355 = vmul.f32 %v354, %v325
    %v356 = vadd.f32 %v352, %v355
    %s357 = sld [smem:[#allocation11]]
    %v358 = vstv %s357
    %v359 = vadd.f32 %v356, %v358
    %v360 = vmul.f32 %v359, 0.01
    %v361 = vmax.f32 %v359, %v360
    %s362 = sld [smem:[#allocation10 + $0x80]]
    %v363 = vstv %s362
    %v364 = vmul.f32 %v363, %v185
    %s365 = sld [smem:[#allocation10 + $0x81]]
    %v366 = vstv %s365
    %v367 = vmul.f32 %v366, %v205
    %v368 = vadd.f32 %v364, %v367
    %s369 = sld [smem:[#allocation10 + $0x82]]
    %v370 = vstv %s369
    %v371 = vmul.f32 %v370, %v225
    %v372 = vadd.f32 %v368, %v371
    %s373 = sld [smem:[#allocation10 + $0x83]]
    %v374 = vstv %s373
    %v375 = vmul.f32 %v374, %v245
    %v376 = vadd.f32 %v372, %v375
    %s377 = sld [smem:[#allocation10 + $0x84]]
    %v378 = vstv %s377
    %v379 = vmul.f32 %v378, %v265
    %v380 = vadd.f32 %v376, %v379
    %s381 = sld [smem:[#allocation10 + $0x85]]
    %v382 = vstv %s381
    %v383 = vmul.f32 %v382, %v285
    %v384 = vadd.f32 %v380, %v383
    %s385 = sld [smem:[#allocation10 + $0x86]]
    %v386 = vstv %s385
    %v387 = vmul.f32 %v386, %v305
    %v388 = vadd.f32 %v384, %v387
    %s389 = sld [smem:[#allocation10 + $0x87]]
    %v390 = vstv %s389
    %v391 = vmul.f32 %v390, %v325
    %v392 = vadd.f32 %v388, %v391
    %s393 = sld [smem:[#allocation11 + $0x1]]
    %v394 = vstv %s393
    %v395 = vadd.f32 %v392, %v394
    %v396 = vmul.f32 %v395, 0.01
    %v397 = vmax.f32 %v395, %v396
    %s398 = sld [smem:[#allocation10 + $0x100]]
    %v399 = vstv %s398
    %v400 = vmul.f32 %v399, %v185
    %s401 = sld [smem:[#allocation10 + $0x101]]
    %v402 = vstv %s401
    %v403 = vmul.f32 %v402, %v205
    %v404 = vadd.f32 %v400, %v403
    %s405 = sld [smem:[#allocation10 + $0x102]]
    %v406 = vstv %s405
    %v407 = vmul.f32 %v406, %v225
    %v408 = vadd.f32 %v404, %v407
    %s409 = sld [smem:[#allocation10 + $0x103]]
    %v410 = vstv %s409
    %v411 = vmul.f32 %v410, %v245
    %v412 = vadd.f32 %v408, %v411
    %s413 = sld [smem:[#allocation10 + $0x104]]
    %v414 = vstv %s413
    %v415 = vmul.f32 %v414, %v265
    %v416 = vadd.f32 %v412, %v415
    %s417 = sld [smem:[#allocation10 + $0x105]]
    %v418 = vstv %s417
    %v419 = vmul.f32 %v418, %v285
    %v420 = vadd.f32 %v416, %v419
    %s421 = sld [smem:[#allocation10 + $0x106]]
    %v422 = vstv %s421
    %v423 = vmul.f32 %v422, %v305
    %v424 = vadd.f32 %v420, %v423
    %s425 = sld [smem:[#allocation10 + $0x107]]
    %v426 = vstv %s425
    %v427 = vmul.f32 %v426, %v325
    %v428 = vadd.f32 %v424, %v427
    %s429 = sld [smem:[#allocation11 + $0x2]]
    %v430 = vstv %s429
    %v431 = vadd.f32 %v428, %v430
    %v432 = vmul.f32 %v431, 0.01
    %v433 = vmax.f32 %v431, %v432
    %s434 = sld [smem:[#allocation10 + $0x180]]
    %v435 = vstv %s434
    %v436 = vmul.f32 %v435, %v185
    %s437 = sld [smem:[#allocation10 + $0x181]]
    %v438 = vstv %s437
    %v439 = vmul.f32 %v438, %v205
    %v440 = vadd.f32 %v436, %v439
    %s441 = sld [smem:[#allocation10 + $0x182]]
    %v442 = vstv %s441
    %v443 = vmul.f32 %v442, %v225
    %v444 = vadd.f32 %v440, %v443
    %s445 = sld [smem:[#allocation10 + $0x183]]
    %v446 = vstv %s445
    %v447 = vmul.f32 %v446, %v245
    %v448 = vadd.f32 %v444, %v447
    %s449 = sld [smem:[#allocation10 + $0x184]]
    %v450 = vstv %s449
    %v451 = vmul.f32 %v450, %v265
    %v452 = vadd.f32 %v448, %v451
    %s453 = sld [smem:[#allocation10 + $0x185]]
    %v454 = vstv %s453
    %v455 = vmul.f32 %v454, %v285
    %v456 = vadd.f32 %v452, %v455
    %s457 = sld [smem:[#allocation10 + $0x186]]
    %v458 = vstv %s457
    %v459 = vmul.f32 %v458, %v305
    %v460 = vadd.f32 %v456, %v459
    %s461 = sld [smem:[#allocation10 + $0x187]]
    %v462 = vstv %s461
    %v463 = vmul.f32 %v462, %v325
    %v464 = vadd.f32 %v460, %v463
    %s465 = sld [smem:[#allocation11 + $0x3]]
    %v466 = vstv %s465
    %v467 = vadd.f32 %v464, %v466
    %v468 = vmul.f32 %v467, 0.01
    %v469 = vmax.f32 %v467, %v468
    %s470 = sld [smem:[#allocation13]]
    %v471 = vstv %s470
    %v472 = vmul.f32 %v471, %v361
    %s473 = sld [smem:[#allocation13 + $0x1]]
    %v474 = vstv %s473
    %v475 = vmul.f32 %v474, %v397
    %v476 = vadd.f32 %v472, %v475
    %s477 = sld [smem:[#allocation13 + $0x2]]
    %v478 = vstv %s477
    %v479 = vmul.f32 %v478, %v433
    %v480 = vadd.f32 %v476, %v479
    %s481 = sld [smem:[#allocation13 + $0x3]]
    %v482 = vstv %s481
    %v483 = vmul.f32 %v482, %v469
    %v484 = vadd.f32 %v480, %v483
    %s485 = sld [smem:[#allocation2]]
    %v486 = vstv %s485
    %v487 = vadd.f32 %v484, %v486
    %v488 = vtanh.pop %v487
    %489 = vst [vmem:[%s9] sm:$0xff] %v488
    // Predicated region
    $region66: #{net_forward.1} parent=1 // pred_check
      _
    $region67: #{net_forward.1} parent=1 // pred_check_branch
      %491 = sbr.rel (0) target = $region69
    $region68: #{net_forward.1} parent=1 // pred_region
      _
    $region69: #{net_forward.1} parent=1 // pred_fallthru
      _
    // Predicated region
    $region70: #{net_forward.1} parent=1 // pred_check
      _
    $region71: #{net_forward.1} parent=1 // pred_check_branch
      %493 = sbr.rel (0) target = $region73
    $region72: #{net_forward.1} parent=1 // pred_region
      _
    $region73: #{net_forward.1} parent=1 // pred_fallthru
      _
    %494 = vsyncpa [#allocation4], 1
    %495 = vsyncpa [#allocation6], 1
    %496 = vsyncpa [#allocation9], 1
    %497 = vsyncpa [#allocation12], 1

</llo_original>
